<compile_context>
chip_gen: v7x
topology: tpu7x:2x2x1
jax: 0.10.0
libtpu: 0.0.40
codegen_flags: <defaults>
</compile_context>

<pallas_src>
import jax
import jax.numpy as jnp
from jax.experimental import pallas as pl
from jax.experimental.pallas import tpu as pltpu

MIB = 1024 * 1024


# ----------------------------------------------------------------------------
# tiling helpers
# ----------------------------------------------------------------------------
def _pick_tile(full, target, aligns=(256, 128, 16, 8)):
    """Largest divisor of `full` <= target, preferring coarse alignment."""
    if full <= target:
        return full
    for align in aligns:
        t = (min(target, full) // align) * align
        while t >= align:
            if full % t == 0:
                return t
            t -= align
    return full  # full extent is always a legal block dim


def _vmem_capacity():
    try:
        info = pltpu.get_tpu_info()
        return int(getattr(info, "vmem_capacity_bytes", 64 * MIB))
    except Exception:  # non-TPU tracing / interpret mode
        return 64 * MIB


def _resident_footprint(tm, D, F):
    """Conservative VMEM bytes for the resident-weight config."""
    x_io = 2 * tm * D * 4            # x tile, f32, double-buffered
    out = 2 * tm * D * 4             # out tile, f32, double-buffered
    w = 2 * (D * F + F * D) * 2      # bf16 weights (count 2 buffers, conservative)
    bias = 2 * (F + D) * 4
    hid = tm * F * (4 + 2)           # f32 hidden + bf16 recast temporaries
    return x_io + out + w + bias + hid


def _stream_footprint(tm, D, tf):
    x_io = 2 * tm * D * 4
    out = 2 * tm * D * 4
    w = 2 * (D * tf + tf * D) * 2
    bias = 2 * (tf + D) * 4
    hid = tm * tf * (4 + 2)
    return x_io + out + w + bias + hid


def _select_config(M, D, F, budget):
    """Returns (tm, tf, resident)."""
    # Prefer fully VMEM-resident weights (weights DMA'd once for whole kernel).
    for tm_target in (512, 384, 256, 128, 64, 32, 16, 8):
        tm = _pick_tile(M, tm_target)
        if _resident_footprint(tm, D, F) <= budget:
            return tm, F, True
    # Streaming fallback: tile d_ff, accumulate over it.
    for tm_target in (768, 512, 384, 256, 128, 64, 32, 16, 8):
        for tf_target in (1024, 512, 256, 128):
            tm = _pick_tile(M, tm_target)
            tf = _pick_tile(F, tf_target, aligns=(256, 128))
            if _stream_footprint(tm, D, tf) <= budget:
                return tm, tf, False
    return _pick_tile(M, 128), _pick_tile(F, 128, aligns=(256, 128)), False


# ----------------------------------------------------------------------------
# kernels
# ----------------------------------------------------------------------------
def _ffn_kernel_resident(x_ref, w1_ref, b1_ref, w2_ref, b2_ref, o_ref):
    """Whole d_ff per step: out = relu(x @ W1t + b1) @ W2t + b2."""
    x = x_ref[...].astype(w1_ref.dtype)                      # f32 -> bf16 in-kernel
    h = jnp.dot(x, w1_ref[...], preferred_element_type=jnp.float32)
    h = jnp.maximum(h + b1_ref[...], 0.0)                    # ReLU in f32
    o = jnp.dot(h.astype(w2_ref.dtype), w2_ref[...],
                preferred_element_type=jnp.float32)
    o_ref[...] = (o + b2_ref[...]).astype(o_ref.dtype)


def _ffn_kernel_stream(x_ref, w1_ref, b1_ref, w2_ref, b2_ref, o_ref):
    """d_ff tiled reduction; accumulate directly into the resident f32 output block."""
    j = pl.program_id(1)

    @pl.when(j == 0)
    def _():
        o_ref[...] = jnp.zeros_like(o_ref)

    x = x_ref[...].astype(w1_ref.dtype)
    h = jnp.dot(x, w1_ref[...], preferred_element_type=jnp.float32)
    h = jnp.maximum(h + b1_ref[...], 0.0)
    o_ref[...] += jnp.dot(h.astype(w2_ref.dtype), w2_ref[...],
                          preferred_element_type=jnp.float32)

    @pl.when(j == pl.num_programs(1) - 1)
    def _():
        o_ref[...] += b2_ref[...]


# ----------------------------------------------------------------------------
# wrapper
# ----------------------------------------------------------------------------
def pallas_positionwise_ffn(packed, x):
    """packed = (w1t bf16 (D, F), b1 f32 (1, F), w2t bf16 (F, D), b2 f32 (1, D));
    x: (B, S, D) float32 -> (B, S, D) float32."""
    w1t, b1, w2t, b2 = packed
    B, S, D = x.shape
    F = w1t.shape[1]
    M = B * S

    x2 = x.reshape(M, D)                       # stays f32; cast happens in-kernel

    cap = _vmem_capacity()
    budget = int(cap * 0.7)
    tm, tf, resident = _select_config(M, D, F, budget)

    # Keep >= 2 M-tiles so both v7x TensorCores (megacore "parallel" axis) get work.
    if M // tm < 2:
        half = tm // 2
        if half >= 8 and half % 8 == 0 and M % half == 0:
            tm = half

    flops = 4 * M * D * F                      # two matmuls

    if resident:
        grid = (M // tm,)
        kernel = _ffn_kernel_resident
        in_specs = [
            pl.BlockSpec((tm, D), lambda i: (i, 0)),      # x tile
            pl.BlockSpec((D, F), lambda i: (0, 0)),       # W1t: constant -> DMA'd once
            pl.BlockSpec((1, F), lambda i: (0, 0)),       # b1
            pl.BlockSpec((F, D), lambda i: (0, 0)),       # W2t: constant -> DMA'd once
            pl.BlockSpec((1, D), lambda i: (0, 0)),       # b2
        ]
        out_specs = pl.BlockSpec((tm, D), lambda i: (i, 0))
        dim_sem = ("parallel",)
        footprint = _resident_footprint(tm, D, F)
        bytes_accessed = 8 * M * D + 2 * (D * F + F * D) + 4 * (F + D)
    else:
        grid = (M // tm, F // tf)
        kernel = _ffn_kernel_stream
        in_specs = [
            pl.BlockSpec((tm, D), lambda i, j: (i, 0)),   # x tile (resident over j)
            pl.BlockSpec((D, tf), lambda i, j: (0, j)),   # W1t tile
            pl.BlockSpec((1, tf), lambda i, j: (0, j)),   # b1 tile
            pl.BlockSpec((tf, D), lambda i, j: (j, 0)),   # W2t tile
            pl.BlockSpec((1, D), lambda i, j: (0, 0)),    # b2
        ]
        out_specs = pl.BlockSpec((tm, D), lambda i, j: (i, 0))
        dim_sem = ("parallel", "arbitrary")
        footprint = _stream_footprint(tm, D, tf)
        n_mtiles = M // tm
        bytes_accessed = 8 * M * D + n_mtiles * 2 * (D * F + F * D) + 4 * (F + D)

    vmem_limit = min(max(int(footprint * 1.5), 32 * MIB), int(cap * 0.95))

    out = pl.pallas_call(
        kernel,
        out_shape=jax.ShapeDtypeStruct((M, D), jnp.float32),
        grid_spec=pltpu.PrefetchScalarGridSpec(
            num_scalar_prefetch=0,
            grid=grid,
            in_specs=in_specs,
            out_specs=out_specs,
        ),
        compiler_params=pltpu.CompilerParams(
            dimension_semantics=dim_sem,
            vmem_limit_bytes=vmem_limit,
        ),
        cost_estimate=pl.CostEstimate(
            flops=flops, transcendentals=0, bytes_accessed=bytes_accessed),
    )(x2, w1t, b1, w2t, b2)
    return out.reshape(B, S, D)


# ----------------------------------------------------------------------------
# params: PyTorch-style init + one-time packing (pre-transposed, bf16 weights)
# ----------------------------------------------------------------------------
def init_ffn_params(key, d_model, d_ff):
    """Mimics nn.Linear(d_model, d_ff) / nn.Linear(d_ff, d_model) init (f32)."""
    k1, k2, k3, k4 = jax.random.split(key, 4)
    b1_bound = 1.0 / (d_model ** 0.5)
    b2_bound = 1.0 / (d_ff ** 0.5)
    w1 = jax.random.uniform(k1, (d_ff, d_model), jnp.float32, -b1_bound, b1_bound)
    b1 = jax.random.uniform(k2, (d_ff,), jnp.float32, -b1_bound, b1_bound)
    w2 = jax.random.uniform(k3, (d_model, d_ff), jnp.float32, -b2_bound, b2_bound)
    b2 = jax.random.uniform(k4, (d_model,), jnp.float32, -b2_bound, b2_bound)
    return (w1, b1, w2, b2)


def pack_ffn_params(params_f32):
    """One-time layout/dtype prep: (D_in, D_out) bf16 weights, (1, N) f32 bias."""
    w1, b1, w2, b2 = params_f32
    return (w1.T.astype(jnp.bfloat16), b1.reshape(1, -1).astype(jnp.float32),
            w2.T.astype(jnp.bfloat16), b2.reshape(1, -1).astype(jnp.float32))


# ----------------------------------------------------------------------------
# plain-JAX f32 reference (matches the PyTorch module semantics)
# ----------------------------------------------------------------------------
def ffn_reference(params_f32, x):
    w1, b1, w2, b2 = params_f32
    h = jnp.maximum(jnp.einsum("bsd,fd->bsf", x, w1) + b1, 0.0)
    return jnp.einsum("bsf,df->bsd", h, w2) + b2


if __name__ == "__main__":
    B, S, D_MODEL, D_FF = 2, 8, 32, 64

    root = jax.random.PRNGKey(0)
    kp, kx = jax.random.split(root)

    params = init_ffn_params(kp, D_MODEL, D_FF)
    packed = pack_ffn_params(params)
    x = jax.random.normal(kx, (B, S, D_MODEL), jnp.float32)

    out = pallas_positionwise_ffn(packed, x)
    out = jax.block_until_ready(out)

    ref = ffn_reference(params, x)
    assert out.shape == (B, S, D_MODEL)
    # bf16 MXU operands with f32 accumulation -> loosened tolerance vs f32 ref.
    assert jnp.allclose(out, ref, atol=5e-2, rtol=5e-2), "mismatch vs reference"

    print("KERNEL_OK")
</pallas_src>

<mosaic_0001>
module attributes {stable_mosaic.version = 11 : i64} {
  func.func @_ffn_kernel_resident(%arg0: i32, %arg1: memref<8x32xf32, #tpu.memory_space<vmem>>, %arg2: memref<32x64xbf16, #tpu.memory_space<vmem>>, %arg3: memref<1x64xf32, #tpu.memory_space<vmem>>, %arg4: memref<64x32xbf16, #tpu.memory_space<vmem>>, %arg5: memref<1x32xf32, #tpu.memory_space<vmem>>, %arg6: memref<8x32xf32, #tpu.memory_space<vmem>>) attributes {dimension_semantics = [#tpu.dimension_semantics<parallel>], iteration_bounds = array<i64: 2>, scalar_prefetch = 0 : i64, scratch_operands = 0 : i64, tpu.core_type = #tpu.core_type<tc>, window_params = [{transform_indices = @transform_0, window_bounds = array<i64: 8, 32>}, {pipeline_mode = #tpu.pipeline_mode<synchronous>, transform_indices = @transform_1, window_bounds = array<i64: 32, 64>}, {pipeline_mode = #tpu.pipeline_mode<synchronous>, transform_indices = @transform_2, window_bounds = array<i64: 1, 64>}, {pipeline_mode = #tpu.pipeline_mode<synchronous>, transform_indices = @transform_3, window_bounds = array<i64: 64, 32>}, {pipeline_mode = #tpu.pipeline_mode<synchronous>, transform_indices = @transform_4, window_bounds = array<i64: 1, 32>}, {transform_indices = @transform_5, window_bounds = array<i64: 8, 32>}]} {
    %c0 = arith.constant 0 : index
    %c0_0 = arith.constant 0 : index
    %0 = vector.load %arg1[%c0, %c0_0] : memref<8x32xf32, #tpu.memory_space<vmem>>, vector<8x32xf32>
    %1 = arith.truncf %0 : vector<8x32xf32> to vector<8x32xbf16>
    %c0_1 = arith.constant 0 : index
    %c0_2 = arith.constant 0 : index
    %2 = vector.load %arg2[%c0_1, %c0_2] : memref<32x64xbf16, #tpu.memory_space<vmem>>, vector<32x64xbf16>
    %cst = arith.constant dense<0.000000e+00> : vector<8x64xf32>
    %3 = tpu.matmul %1, %2, %cst {dimension_numbers = #tpu.dot_dimension_numbers<[1], [0], [0], [1], [0, 0, 1, 1], [], []>} : vector<8x32xbf16>, vector<32x64xbf16>, vector<8x64xf32> -> vector<8x64xf32>
    %c0_3 = arith.constant 0 : index
    %c0_4 = arith.constant 0 : index
    %4 = vector.load %arg3[%c0_3, %c0_4] : memref<1x64xf32, #tpu.memory_space<vmem>>, vector<1x64xf32>
    %5 = vector.broadcast %4 : vector<1x64xf32> to vector<8x64xf32>
    %6 = arith.addf %3, %5 : vector<8x64xf32>
    %cst_5 = arith.constant 0.000000e+00 : f32
    %7 = vector.broadcast %cst_5 : f32 to vector<8x64xf32>
    %8 = arith.maximumf %6, %7 : vector<8x64xf32>
    %9 = arith.truncf %8 : vector<8x64xf32> to vector<8x64xbf16>
    %c0_6 = arith.constant 0 : index
    %c0_7 = arith.constant 0 : index
    %10 = vector.load %arg4[%c0_6, %c0_7] : memref<64x32xbf16, #tpu.memory_space<vmem>>, vector<64x32xbf16>
    %cst_8 = arith.constant dense<0.000000e+00> : vector<8x32xf32>
    %11 = tpu.matmul %9, %10, %cst_8 {dimension_numbers = #tpu.dot_dimension_numbers<[1], [0], [0], [1], [0, 0, 1, 1], [], []>} : vector<8x64xbf16>, vector<64x32xbf16>, vector<8x32xf32> -> vector<8x32xf32>
    %c0_9 = arith.constant 0 : index
    %c0_10 = arith.constant 0 : index
    %12 = vector.load %arg5[%c0_9, %c0_10] : memref<1x32xf32, #tpu.memory_space<vmem>>, vector<1x32xf32>
    %13 = vector.broadcast %12 : vector<1x32xf32> to vector<8x32xf32>
    %14 = arith.addf %11, %13 : vector<8x32xf32>
    %c0_11 = arith.constant 0 : index
    %c0_12 = arith.constant 0 : index
    %15 = vector.load %arg6[%c0_11, %c0_12] : memref<8x32xf32, #tpu.memory_space<vmem>>, vector<8x32xf32>
    tpu.vector_store %arg6[%c0_11, %c0_12], %14 {strides = array<i32>} : memref<8x32xf32, #tpu.memory_space<vmem>>, vector<8x32xf32>,
    return
  }
  func.func @transform_0(%arg0: i32) -> (i32, i32) {
    %c0_i32 = arith.constant 0 : i32
    %c0_i32_0 = arith.constant 0 : i32
    return %arg0, %c0_i32 : i32, i32
  }
  func.func @transform_1(%arg0: i32) -> (i32, i32) {
    %c0_i32 = arith.constant 0 : i32
    %c0_i32_0 = arith.constant 0 : i32
    %c0_i32_1 = arith.constant 0 : i32
    return %c0_i32, %c0_i32_0 : i32, i32
  }
  func.func @transform_2(%arg0: i32) -> (i32, i32) {
    %c0_i32 = arith.constant 0 : i32
    %c0_i32_0 = arith.constant 0 : i32
    %c0_i32_1 = arith.constant 0 : i32
    return %c0_i32, %c0_i32_0 : i32, i32
  }
  func.func @transform_3(%arg0: i32) -> (i32, i32) {
    %c0_i32 = arith.constant 0 : i32
    %c0_i32_0 = arith.constant 0 : i32
    %c0_i32_1 = arith.constant 0 : i32
    return %c0_i32, %c0_i32_0 : i32, i32
  }
  func.func @transform_4(%arg0: i32) -> (i32, i32) {
    %c0_i32 = arith.constant 0 : i32
    %c0_i32_0 = arith.constant 0 : i32
    %c0_i32_1 = arith.constant 0 : i32
    return %c0_i32, %c0_i32_0 : i32, i32
  }
  func.func @transform_5(%arg0: i32) -> (i32, i32) {
    %c0_i32 = arith.constant 0 : i32
    %c0_i32_0 = arith.constant 0 : i32
    return %arg0, %c0_i32 : i32, i32
  }
}

</mosaic_0001>

<llo_original>
// kernel: tpu_custom_call.1
$region0: #{tpu_custom_call.1}
  #allocation0 [shape = 'u32[]', space=smem, size = 0x4, offset = 0x4, fixed_abs, tag = 'smem constant byte address 0x4 - core index']
  #allocation1 [shape = 'u32[144,128]{1,0:T(1,128)}', space=vmem, size = 0x12000, scoped, tag = 'internal scratch']
  %s0 = inlined_call_operand.vmem [shape: f32[16,32], index: 0, kind: input, shape index: {}]
  %s1 = inlined_call_operand.vmem [shape: bf16[32,64], index: 1, kind: input, shape index: {}]
  %s2 = inlined_call_operand.vmem [shape: f32[1,64], index: 2, kind: input, shape index: {}]
  %s3 = inlined_call_operand.vmem [shape: bf16[64,32], index: 3, kind: input, shape index: {}]
  %s4 = inlined_call_operand.vmem [shape: f32[1,32], index: 4, kind: input, shape index: {}]
  %s5 = inlined_call_operand.hbm [shape: f32[16,32], index: 5, kind: output, shape index: {}]
  %s6 = sld [smem:[#allocation0]]
  $region53: #{tpu_custom_call.1} parent=0
    _
  %s8 = ssub.s32 1, %s6
  %s9 = scalar_select 0, %s8, %s6
  $region1: #{tpu_custom_call.1} parent=0
    #allocation2 [shape = 'u8[8192]{0}', space=vmem, size = 0x2000, scoped, tag = 'output window, operand 0']
    #allocation3 [shape = 's32[2]{0}', space=sflag, size = 0x8, scoped, tag = 'scoped memory for tpu_custom_call.1']
    %10 = vsyncpa [#allocation3], 0
    %s11 = scalar_lea.sflag [#allocation3], 1
    %12 = vsyncpa %s11, 0
    loop: start=0, step=1, limit=4
    $region2: #{tpu_custom_call.1} parent=1 // loop_pre_header
      _
    $region3: #{tpu_custom_call.1} parent=1 // loop_header
      %s14 = sphi 0, %s18
      %p15 = scmp.ge.s32.totalorder %s14, 4
      %s24 = sphi 0, %s26
      %s27 = sphi 0, %s24
      %s28 = sphi 0, %s27
      %s44 = sphi 0, %s28
      %s48 = sphi 0, %s48
      %s50 = sphi 0, %s48
      %s51 = sphi 0, %s50
      %s65 = sphi 0, %s51
      %s69 = sphi 0, %s69
      %s71 = sphi 0, %s69
      %s72 = sphi 0, %s71
      %s86 = sphi 0, %s72
      %s90 = sphi 0, %s90
      %s92 = sphi 0, %s90
      %s93 = sphi 0, %s92
      %s107 = sphi 0, %s93
      %s111 = sphi 0, %s111
      %s113 = sphi 0, %s111
      %s114 = sphi 0, %s113
      %s128 = sphi 0, %s114
      %s134 = sphi 0, %s136
      %s137 = sphi 0, %s134
      %s138 = sphi 0, %s137
      %s154 = sphi 0, %s138
    $region4: #{tpu_custom_call.1} parent=1 // loop_header_branch
      %17 = sbr.rel (%p15) target = $region8
    $region5: #{tpu_custom_call.1} parent=1 // loop_body
      %s19 = ssub.s32 %s14, 1
      %s20 = ssub.s32 %s14, 2
      %s21 = sadd.s32 %s14, 1
      %s22 = ssub.s32 %s14, %s21
      %p23 = scmp.eq.s32.totalorder %s22, 0
      %s25 = sadd.s32 %s24, 1
      %s26 = scalar_select %p23, %s24, %s25
      %p29 = pneg %p23
      %p30 = scmp.eq.s32.totalorder %s14, 1
      %p31 = por %p29, %p30
      %p32 = scmp.ne.s32.totalorder %s24, %s27
      %p33 = scmp.eq.s32.totalorder %s14, 0
      %p34 = por %p32, %p33
      %p35 = scmp.ne.s32.totalorder %s24, %s27
      %p36 = scmp.eq.s32.totalorder %s19, 1
      %p37 = por %p35, %p36
      %p38 = scmp.ne.s32.totalorder %s27, %s28
      %p39 = scmp.eq.s32.totalorder %s19, 0
      %p40 = por %p38, %p39
      %p41 = scmp.ne.s32.totalorder %s27, %s28
      %p42 = scmp.eq.s32.totalorder %s20, 1
      %p43 = por %p41, %p42
      %p45 = scmp.ne.s32.totalorder %s28, %s44
      %p46 = scmp.eq.s32.totalorder %s20, 0
      %p47 = por %p45, %p46
      %s49 = sadd.s32 %s48, 1
      %p52 = scmp.eq.s32.totalorder %s14, 1
      %p53 = scmp.ne.s32.totalorder %s48, %s50
      %p54 = scmp.eq.s32.totalorder %s14, 0
      %p55 = por %p53, %p54
      %p56 = scmp.ne.s32.totalorder %s48, %s50
      %p57 = scmp.eq.s32.totalorder %s19, 1
      %p58 = por %p56, %p57
      %p59 = scmp.ne.s32.totalorder %s50, %s51
      %p60 = scmp.eq.s32.totalorder %s19, 0
      %p61 = por %p59, %p60
      %p62 = scmp.ne.s32.totalorder %s50, %s51
      %p63 = scmp.eq.s32.totalorder %s20, 1
      %p64 = por %p62, %p63
      %p66 = scmp.ne.s32.totalorder %s51, %s65
      %p67 = scmp.eq.s32.totalorder %s20, 0
      %p68 = por %p66, %p67
      %s70 = sadd.s32 %s69, 1
      %p73 = scmp.eq.s32.totalorder %s14, 1
      %p74 = scmp.ne.s32.totalorder %s69, %s71
      %p75 = scmp.eq.s32.totalorder %s14, 0
      %p76 = por %p74, %p75
      %p77 = scmp.ne.s32.totalorder %s69, %s71
      %p78 = scmp.eq.s32.totalorder %s19, 1
      %p79 = por %p77, %p78
      %p80 = scmp.ne.s32.totalorder %s71, %s72
      %p81 = scmp.eq.s32.totalorder %s19, 0
      %p82 = por %p80, %p81
      %p83 = scmp.ne.s32.totalorder %s71, %s72
      %p84 = scmp.eq.s32.totalorder %s20, 1
      %p85 = por %p83, %p84
      %p87 = scmp.ne.s32.totalorder %s72, %s86
      %p88 = scmp.eq.s32.totalorder %s20, 0
      %p89 = por %p87, %p88
      %s91 = sadd.s32 %s90, 1
      %p94 = scmp.eq.s32.totalorder %s14, 1
      %p95 = scmp.ne.s32.totalorder %s90, %s92
      %p96 = scmp.eq.s32.totalorder %s14, 0
      %p97 = por %p95, %p96
      %p98 = scmp.ne.s32.totalorder %s90, %s92
      %p99 = scmp.eq.s32.totalorder %s19, 1
      %p100 = por %p98, %p99
      %p101 = scmp.ne.s32.totalorder %s92, %s93
      %p102 = scmp.eq.s32.totalorder %s19, 0
      %p103 = por %p101, %p102
      %p104 = scmp.ne.s32.totalorder %s92, %s93
      %p105 = scmp.eq.s32.totalorder %s20, 1
      %p106 = por %p104, %p105
      %p108 = scmp.ne.s32.totalorder %s93, %s107
      %p109 = scmp.eq.s32.totalorder %s20, 0
      %p110 = por %p108, %p109
      %s112 = sadd.s32 %s111, 1
      %p115 = scmp.eq.s32.totalorder %s14, 1
      %p116 = scmp.ne.s32.totalorder %s111, %s113
      %p117 = scmp.eq.s32.totalorder %s14, 0
      %p118 = por %p116, %p117
      %p119 = scmp.ne.s32.totalorder %s111, %s113
      %p120 = scmp.eq.s32.totalorder %s19, 1
      %p121 = por %p119, %p120
      %p122 = scmp.ne.s32.totalorder %s113, %s114
      %p123 = scmp.eq.s32.totalorder %s19, 0
      %p124 = por %p122, %p123
      %p125 = scmp.ne.s32.totalorder %s113, %s114
      %p126 = scmp.eq.s32.totalorder %s20, 1
      %p127 = por %p125, %p126
      %p129 = scmp.ne.s32.totalorder %s114, %s128
      %p130 = scmp.eq.s32.totalorder %s20, 0
      %p131 = por %p129, %p130
      %s132 = ssub.s32 %s14, %s21
      %p133 = scmp.eq.s32.totalorder %s132, 0
      %s135 = sadd.s32 %s134, 1
      %s136 = scalar_select %p133, %s134, %s135
      %p139 = pneg %p133
      %p140 = scmp.eq.s32.totalorder %s14, 1
      %p141 = por %p139, %p140
      %p142 = scmp.ne.s32.totalorder %s134, %s137
      %p143 = scmp.eq.s32.totalorder %s14, 0
      %p144 = por %p142, %p143
      %p145 = scmp.ne.s32.totalorder %s134, %s137
      %p146 = scmp.eq.s32.totalorder %s19, 1
      %p147 = por %p145, %p146
      %p148 = scmp.ne.s32.totalorder %s137, %s138
      %p149 = scmp.eq.s32.totalorder %s19, 0
      %p150 = por %p148, %p149
      %p151 = scmp.ne.s32.totalorder %s137, %s138
      %p152 = scmp.eq.s32.totalorder %s20, 1
      %p153 = por %p151, %p152
      %p155 = scmp.ne.s32.totalorder %s138, %s154
      %p156 = scmp.eq.s32.totalorder %s20, 0
      %p157 = por %p155, %p156
      %p158 = scmp.le.s32.totalorder 1, %s14
      %p159 = scmp.lt.s32.totalorder %s14, 3
      %p160 = pnand %p158, %p159
      %p161 = pneg %p160
      // Predicated region
      $region9: #{tpu_custom_call.1} parent=5 // pred_check
        _
      $region10: #{tpu_custom_call.1} parent=5 // pred_check_branch
        %163 = sbr.rel (%p160) target = $region12
      $region11: #{tpu_custom_call.1} parent=5 // pred_region
        %s164 = ssub.s32 %s14, 1
        // Predicated region
        $region13: #{tpu_custom_call.1} parent=11 // pred_check
          %p165 = pneg %p61
        $region14: #{tpu_custom_call.1} parent=11 // pred_check_branch
          %167 = sbr.rel (%p165) target = $region16
        $region15: #{tpu_custom_call.1} parent=11 // pred_region
          _
        $region16: #{tpu_custom_call.1} parent=11 // pred_fallthru
          _
        // Predicated region
        $region17: #{tpu_custom_call.1} parent=11 // pred_check
          %p168 = pneg %p82
        $region18: #{tpu_custom_call.1} parent=11 // pred_check_branch
          %170 = sbr.rel (%p168) target = $region20
        $region19: #{tpu_custom_call.1} parent=11 // pred_region
          _
        $region20: #{tpu_custom_call.1} parent=11 // pred_fallthru
          _
        // Predicated region
        $region21: #{tpu_custom_call.1} parent=11 // pred_check
          %p171 = pneg %p103
        $region22: #{tpu_custom_call.1} parent=11 // pred_check_branch
          %173 = sbr.rel (%p171) target = $region24
        $region23: #{tpu_custom_call.1} parent=11 // pred_region
          _
        $region24: #{tpu_custom_call.1} parent=11 // pred_fallthru
          _
        // Predicated region
        $region25: #{tpu_custom_call.1} parent=11 // pred_check
          %p174 = pneg %p124
        $region26: #{tpu_custom_call.1} parent=11 // pred_check_branch
          %176 = sbr.rel (%p174) target = $region28
        $region27: #{tpu_custom_call.1} parent=11 // pred_region
          _
        $region28: #{tpu_custom_call.1} parent=11 // pred_fallthru
          _
      $region12: #{tpu_custom_call.1} parent=5 // pred_fallthru
        _
      %p177 = scmp.lt.s32.totalorder %s14, 2
      // Predicated region
      $region29: #{tpu_custom_call.1} parent=5 // pred_check
        %p178 = pneg %p177
      $region30: #{tpu_custom_call.1} parent=5 // pred_check_branch
        %180 = sbr.rel (%p178) target = $region32
      $region31: #{tpu_custom_call.1} parent=5 // pred_region
        // Predicated region
        $region33: #{tpu_custom_call.1} parent=31 // pred_check
          %p181 = pneg %p34
        $region34: #{tpu_custom_call.1} parent=31 // pred_check_branch
          %183 = sbr.rel (%p181) target = $region36
        $region35: #{tpu_custom_call.1} parent=31 // pred_region
          %p184 = scmp.lt.s32.totalorder %s14, 1
          %s185 = scalar_select %p184, %s14, 1
          %s186 = smul.addr %s185, 8
          %s187 = scalar_lea.vmem %s0, %s186
        $region36: #{tpu_custom_call.1} parent=31 // pred_fallthru
          _
      $region32: #{tpu_custom_call.1} parent=5 // pred_fallthru
        _
      %p188 = scmp.le.s32.totalorder 1, %s14
      %p189 = scmp.lt.s32.totalorder %s14, 3
      %p190 = pnand %p188, %p189
      %p191 = pneg %p190
      // Predicated region
      $region37: #{tpu_custom_call.1} parent=5 // pred_check
        _
      $region38: #{tpu_custom_call.1} parent=5 // pred_check_branch
        %193 = sbr.rel (%p190) target = $region40
      $region39: #{tpu_custom_call.1} parent=5 // pred_region
        %s194 = ssub.s32 %s14, 1
        %p195 = scmp.lt.s32.totalorder %s19, 1
        %s196 = scalar_select %p195, %s19, 1
        %s197 = smul.addr %s196, 8
        %s198 = scalar_lea.vmem %s0, %s197
        %p199 = pneg %p40
        %p200 = pneg %p37
        %p201 = pneg %p61
        %p202 = pneg %p58
        %p203 = pneg %p82
        %p204 = pneg %p79
        %p205 = pneg %p103
        %p206 = pneg %p100
        %p207 = pneg %p124
        %p208 = pneg %p121
        %p209 = pneg %p150
        %p210 = pneg %p147
        %s211 = sand.u32 %s137, 1
        %s212 = scalar_lea.sflag [#allocation3], %s211
        %s213 = sand.u32 %s137, 1
        %s214 = smul.addr %s213, 8
        %s215 = scalar_lea.vmem [#allocation2], %s214
        %p216 = scmp.lt.s32.totalorder %s19, 1
        %s217 = scalar_select %p216, %s19, 1
        %s218 = smul.addr %s217, 8
        %s219 = scalar_lea.vmem %s0, %s218
        %v221 = vld [vmem:[%s219] sm:$0xff]
        %v222 = vpack.c.bf16 %v221, %v221
        %v223 = vld [vmem:[%s1] sm:$0xf]
        %v224 = vld [vmem:[%s1 + $0x4] sm:$0xf]
        %v225 = vld [vmem:[%s1 + $0x8] sm:$0xf]
        %v226 = vld [vmem:[%s1 + $0xc] sm:$0xf]
        %v227 = vld [vmem:[%s2] sm:$0x1]
        %v229 = vlaneseq
        %v230 = vshrl.u32 %v229, 7
        %v231 = vsub.s32 0, %v230
        %v232 = vrot.slane %v227, %v231
        %v238 = vunpack.c.l.b16 %v223
        %v239 = vunpack.c.l.b16 %v224
        %v240 = vunpack.c.l.b16 %v225
        %v241 = vunpack.c.l.b16 %v226
        %v242 = vpack.c.b16 %v239, %v238
        %v243 = vpack.c.b16 %v241, %v240
        %vm246 = vcmask 261120
        %v248 = vsel %vm246, %v222, 0
        %250 = vmatprep.subr.bf16.mxu0 0
        %251 = vmatpush1.bf16.msra.mxu0 %v242
        %252 = vmatprep.subr.bf16.mxu0 0
        %253 = vmatpush1.bf16.msra.mxu0 %v243
        %254 = vmatprep.subr.bf16.mxu0 0
        %255 = vmatpush1.bf16.msra.mxu0 0
        %256 = vmatprep.subr.bf16.mxu0 0
        %257 = vmatpush1.bf16.msra.mxu0 0
        %258 = vmatprep.subr.bf16.mxu0 0
        %259 = vmatpush1.bf16.msra.mxu0 0
        %260 = vmatprep.subr.bf16.mxu0 0
        %261 = vmatpush1.bf16.msra.mxu0 0
        %262 = vmatprep.subr.bf16.mxu0 0
        %263 = vmatpush1.bf16.msra.mxu0 0
        %264 = vmatprep.subr.bf16.mxu0 0
        %265 = vmatpush1.bf16.msra.mxu0 0
        %266 = vmatprep.subr.bf16.mxu0 0
        %267 = vmatpush1.bf16.msra.mxu0 0
        %268 = vmatprep.subr.bf16.mxu0 0
        %269 = vmatpush1.bf16.msra.mxu0 0
        %270 = vmatprep.subr.bf16.mxu0 0
        %271 = vmatpush1.bf16.msra.mxu0 0
        %272 = vmatprep.subr.bf16.mxu0 0
        %273 = vmatpush1.bf16.msra.mxu0 0
        %274 = vmatprep.subr.bf16.mxu0 0
        %275 = vmatpush1.bf16.msra.mxu0 0
        %276 = vmatprep.subr.bf16.mxu0 0
        %277 = vmatpush1.bf16.msra.mxu0 0
        %278 = vmatprep.subr.bf16.mxu0 0
        %279 = vmatpush1.bf16.msra.mxu0 0
        %280 = vmatprep.subr.bf16.mxu0 0
        %281 = vmatpush1.bf16.msra.mxu0 0
        %282 = vmatprep.mubr.bf16.mxu0 0
        %283 = vmatmul.mubr.bf16.gmra.mrb[0].mxu0 %v248
        %v284 = vpop.f32.mrb[0].mxu0
        %v285 = vadd.f32 %v232, %v284
        %v286 = vpop.f32.mrb[0].mxu0
        %v287 = vpop.f32.mrb[0].mxu0
        %v288 = vpop.f32.mrb[0].mxu0
        %289 = vdwg.mxu0
        %v290 = vmax.f32 %v285, 0.0
        %v291 = vpack.c.bf16 %v290, %v290
        %v292 = vld [vmem:[%s3] sm:$0xf]
        %v293 = vld [vmem:[%s3 + $0x4] sm:$0xf]
        %v294 = vld [vmem:[%s3 + $0x8] sm:$0xf]
        %v295 = vld [vmem:[%s3 + $0xc] sm:$0xf]
        %v296 = vld [vmem:[%s3 + $0x10] sm:$0xf]
        %v297 = vld [vmem:[%s3 + $0x14] sm:$0xf]
        %v298 = vld [vmem:[%s3 + $0x18] sm:$0xf]
        %v299 = vld [vmem:[%s3 + $0x1c] sm:$0xf]
        %v300 = vld [vmem:[%s4] sm:$0x1]
        %v302 = vlaneseq
        %v303 = vshrl.u32 %v302, 7
        %v304 = vsub.s32 0, %v303
        %v305 = vrot.slane %v300, %v304
        %v315 = vunpack.c.l.b16 %v292
        %v316 = vunpack.c.l.b16 %v293
        %v317 = vunpack.c.l.b16 %v294
        %v318 = vunpack.c.l.b16 %v295
        %v319 = vunpack.c.l.b16 %v296
        %v320 = vunpack.c.l.b16 %v297
        %v321 = vunpack.c.l.b16 %v298
        %v322 = vunpack.c.l.b16 %v299
        %v323 = vpack.c.b16 %v316, %v315
        %v324 = vpack.c.b16 %v318, %v317
        %v325 = vpack.c.b16 %v320, %v319
        %v326 = vpack.c.b16 %v322, %v321
        %vm331 = vcmask 523264
        %v333 = vsel %vm331, %v291, 0
        %335 = vmatprep.subr.bf16.mxu0 0
        %336 = vmatpush1.bf16.msra.mxu0 %v323
        %337 = vmatprep.subr.bf16.mxu0 0
        %338 = vmatpush1.bf16.msra.mxu0 %v324
        %339 = vmatprep.subr.bf16.mxu0 0
        %340 = vmatpush1.bf16.msra.mxu0 %v325
        %341 = vmatprep.subr.bf16.mxu0 0
        %342 = vmatpush1.bf16.msra.mxu0 %v326
        %343 = vmatprep.subr.bf16.mxu0 0
        %344 = vmatpush1.bf16.msra.mxu0 0
        %345 = vmatprep.subr.bf16.mxu0 0
        %346 = vmatpush1.bf16.msra.mxu0 0
        %347 = vmatprep.subr.bf16.mxu0 0
        %348 = vmatpush1.bf16.msra.mxu0 0
        %349 = vmatprep.subr.bf16.mxu0 0
        %350 = vmatpush1.bf16.msra.mxu0 0
        %351 = vmatprep.subr.bf16.mxu0 0
        %352 = vmatpush1.bf16.msra.mxu0 0
        %353 = vmatprep.subr.bf16.mxu0 0
        %354 = vmatpush1.bf16.msra.mxu0 0
        %355 = vmatprep.subr.bf16.mxu0 0
        %356 = vmatpush1.bf16.msra.mxu0 0
        %357 = vmatprep.subr.bf16.mxu0 0
        %358 = vmatpush1.bf16.msra.mxu0 0
        %359 = vmatprep.subr.bf16.mxu0 0
        %360 = vmatpush1.bf16.msra.mxu0 0
        %361 = vmatprep.subr.bf16.mxu0 0
        %362 = vmatpush1.bf16.msra.mxu0 0
        %363 = vmatprep.subr.bf16.mxu0 0
        %364 = vmatpush1.bf16.msra.mxu0 0
        %365 = vmatprep.subr.bf16.mxu0 0
        %366 = vmatpush1.bf16.msra.mxu0 0
        %367 = vmatprep.mubr.bf16.mxu0 0
        %368 = vmatmul.mubr.bf16.gmra.mrb[0].mxu0 %v333
        %v369 = vpop.f32.mrb[0].mxu0
        %v370 = vadd.f32 %v305, %v369
        %v371 = vpop.f32.mrb[0].mxu0
        %v372 = vpop.f32.mrb[0].mxu0
        %v373 = vpop.f32.mrb[0].mxu0
        %374 = vdwg.mxu0
        %375 = vst.msk [vmem:[%s215] sm:$0xff] %vm246, %v370
        %s376 = sand.u32 %s137, 1
        %s377 = scalar_lea.sflag [#allocation3], %s376
        %s378 = sand.u32 %s137, 1
        %s379 = smul.addr %s378, 8
        %s380 = scalar_lea.vmem [#allocation2], %s379
        // Predicated region
        $region41: #{tpu_custom_call.1} parent=39 // pred_check
          %p381 = pneg %p147
        $region42: #{tpu_custom_call.1} parent=39 // pred_check_branch
          %383 = sbr.rel (%p381) target = $region44
        $region43: #{tpu_custom_call.1} parent=39 // pred_region
          %s385 = ssub.s32 128, 128
          %386 = vsyncadd %s377, %s385
          %s387 = smul.addr %s19, 128
          %s388 = scalar_lea.hbm %s5, %s387
          %s390 = sshll.u32 %s380, 4
          %s391 = int_to_ptr.vmem [resolvable:$true] %s390
          %393 = dma.vmem_to_hbm [thread:$0]  %s391, 128, %s388, %s377
        $region44: #{tpu_custom_call.1} parent=39 // pred_fallthru
          _
      $region40: #{tpu_custom_call.1} parent=5 // pred_fallthru
        _
      %p394 = scmp.le.s32.totalorder 2, %s14
      // Predicated region
      $region45: #{tpu_custom_call.1} parent=5 // pred_check
        %p395 = pneg %p394
      $region46: #{tpu_custom_call.1} parent=5 // pred_check_branch
        %397 = sbr.rel (%p395) target = $region48
      $region47: #{tpu_custom_call.1} parent=5 // pred_region
        %s398 = ssub.s32 %s14, 2
        // Predicated region
        $region49: #{tpu_custom_call.1} parent=47 // pred_check
          %p399 = pneg %p153
        $region50: #{tpu_custom_call.1} parent=47 // pred_check_branch
          %401 = sbr.rel (%p399) target = $region52
        $region51: #{tpu_custom_call.1} parent=47 // pred_region
          %s402 = sand.u32 %s138, 1
          %s403 = scalar_lea.sflag [#allocation3], %s402
          %s404 = sand.u32 %s138, 1
          %s405 = smul.addr %s404, 8
          %s406 = scalar_lea.vmem [#allocation2], %s405
          %407 = dma.done %s403, 128
        $region52: #{tpu_custom_call.1} parent=47 // pred_fallthru
          _
      $region48: #{tpu_custom_call.1} parent=5 // pred_fallthru
        _
    $region6: #{tpu_custom_call.1} parent=1 // loop_footer
      %s18 = sadd.s32 1, %s14
    $region7: #{tpu_custom_call.1} parent=1 // loop_footer_branch
      %13 = sbr.rel target = $region3
    $region8: #{tpu_custom_call.1} parent=1 // loop_exit
      _
    %408 = vsyncpa [#allocation3], 1
    %s409 = scalar_lea.sflag [#allocation3], 1
    %410 = vsyncpa %s409, 1

</llo_original>
